<compile_context>
chip_gen: v5e
topology: v5e:2x2
jax: 0.10.0
libtpu: 0.0.40
codegen_flags: <defaults>
</compile_context>

<pallas_src>
import numpy as np
import jax
import jax.numpy as jnp
from jax.experimental import pallas as pl
from jax.experimental.pallas import tpu as pltpu


def _softplus(x):
    # numerically-stable softplus that lowers cleanly in Mosaic
    return jnp.maximum(x, 0.0) + jnp.log(1.0 + jnp.exp(-jnp.abs(x)))


def _round_up(x, m):
    return ((x + m - 1) // m) * m


# ---------------------------------------------------------------------------
# Kernel
# ---------------------------------------------------------------------------
def _make_kernel(*, output_size, num_tasks, tile, tiles_per_core,
                 is_deterministic, fuse_finalize):
    def kernel(*refs):
        offs_ref = refs[0]                                   # (T+1,) int32 in SMEM
        (h_ref, w1_ref, b1_ref, w2_ref, b2_ref,
         wmu_ref, wsg_ref, bmu_ref, bsg_ref) = refs[1:10]
        idx = 10
        eps_ref = None
        if fuse_finalize and not is_deterministic:
            eps_ref = refs[idx]
            idx += 1
        if fuse_finalize:
            z_ref, kl_ref = refs[idx], refs[idx + 1]
        else:
            pr_ref, pm_ref = refs[idx], refs[idx + 1]
        acc_r_ref, acc_m_ref = refs[idx + 2], refs[idx + 3]

        c = pl.program_id(0)          # core split (parallel)
        r = pl.program_id(1)          # row-tile reduction (arbitrary)

        @pl.when(r == 0)
        def _init():
            acc_r_ref[...] = jnp.zeros_like(acc_r_ref)
            acc_m_ref[...] = jnp.zeros_like(acc_m_ref)

        # ---- MLP on this row tile (bf16 MXU inputs, f32 accumulation + relu) ----
        h = h_ref[...]                                                     # (tile, in) bf16
        h = jnp.maximum(
            jnp.dot(h, w1_ref[...], preferred_element_type=jnp.float32) + b1_ref[...], 0.0)
        h = jnp.maximum(
            jnp.dot(h.astype(jnp.bfloat16), w2_ref[...],
                    preferred_element_type=jnp.float32) + b2_ref[...], 0.0)
        hb = h.astype(jnp.bfloat16)

        # ---- split mu / sigma heads (no sub-lane slicing of a fused head) ----
        mu = jnp.dot(hb, wmu_ref[...], preferred_element_type=jnp.float32) + bmu_ref[...]
        sig_pre = jnp.dot(hb, wsg_ref[...], preferred_element_type=jnp.float32) + bsg_ref[...]
        sigma_sq = jnp.maximum(_softplus(sig_pre), 1e-7)   # F.softplus + clamp(min=1e-7)
        recip = 1.0 / sigma_sq                             # exact; kernel is not EUP/VPU bound

        # ---- segment mask built in-register from scalar-prefetched row offsets ----
        tile_idx = c * tiles_per_core + r
        gidx = tile_idx * tile + jax.lax.broadcasted_iota(jnp.int32, (1, tile), 1)
        task_id = jnp.zeros((1, tile), jnp.int32)
        for t in range(1, num_tasks):                      # small T, unrolled scalar reads
            task_id = task_id + (gidx >= offs_ref[t]).astype(jnp.int32)
        valid = gidx < offs_ref[num_tasks]                 # drop zero-padded rows
        t_iota = jax.lax.broadcasted_iota(jnp.int32, (num_tasks, tile), 0)
        mask = jnp.where((task_id == t_iota) & valid, 1.0, 0.0).astype(jnp.float32)

        # ---- per-task product-of-gaussians partial sums (f32 MXU matmuls) ----
        acc_r_ref[...] += jnp.dot(mask, recip, preferred_element_type=jnp.float32)
        acc_m_ref[...] += jnp.dot(mask, mu * recip, preferred_element_type=jnp.float32)

        @pl.when(r == pl.num_programs(1) - 1)
        def _finalize():
            sum_recip = acc_r_ref[...]                     # sum 1/sigma^2
            sum_muw = acc_m_ref[...]                       # sum mu/sigma^2
            if fuse_finalize:
                z_var = 1.0 / sum_recip
                z_mean = z_var * sum_muw
                if is_deterministic:
                    z = z_mean
                else:
                    z = z_mean + jnp.sqrt(z_var) * eps_ref[...]          # rsample
                z_ref[...] = z.astype(z_ref.dtype)
                # KL(N(z_mean, sqrt(z_var)) || N(0,1)); log(z_var) == -log(sum_recip)
                kl_elem = 0.5 * (jnp.log(sum_recip) + z_var + z_mean * z_mean - 1.0)
                kl_task = jnp.sum(kl_elem, axis=-1, keepdims=True)       # (T, 1)
                kl_ref[...] = jnp.sum(kl_task, axis=0, keepdims=True) / float(num_tasks)
            else:
                pr_ref[0] = sum_recip                      # per-core partials, combined in JAX
                pm_ref[0] = sum_muw

    return kernel


# ---------------------------------------------------------------------------
# Wrapper
# ---------------------------------------------------------------------------
def gaussian_encoder_forward(h_rows, params, row_offsets, eps=None, *,
                             is_deterministic=False, row_tile=2048, num_cores=1):
    """Runs the Pallas kernel. Returns (z, kl_div_mean)."""
    w1, b1, w2, b2, wl_mu, wl_sig, bl_mu, bl_sig = params
    total_rows, input_size = h_rows.shape
    num_tasks = int(row_offsets.shape[0]) - 1
    output_size = wl_mu.shape[1]
    h1 = w1.shape[1]
    h2 = w2.shape[1]

    fuse_finalize = (num_cores == 1)

    # Tile selection: one big tile when the batch fits (per-step overhead dominates at
    # small tiles); otherwise row_tile-sized chunks.  Working set is <1 MiB even at
    # tile=4096, so the same large tile is safe on v5e / v6e / v7x (64 MiB VMEM).
    if num_cores == 1 and total_rows <= row_tile:
        tile = max(_round_up(total_rows, 8), 8)
        tiles_per_core = 1
    else:
        tile = row_tile
        assert tile % 8 == 0, "row_tile must be a multiple of 8"
        n_tiles = -(-total_rows // tile)
        tiles_per_core = -(-n_tiles // num_cores)
    padded = tile * tiles_per_core * num_cores
    pad = padded - total_rows

    bf16 = jnp.bfloat16
    h_rows = h_rows.astype(bf16)
    if pad:
        h_rows = jnp.pad(h_rows, ((0, pad), (0, 0)))   # padded rows masked out in-kernel
    w1b, w2b = w1.astype(bf16), w2.astype(bf16)
    wmub, wsgb = wl_mu.astype(bf16), wl_sig.astype(bf16)
    row_offsets = row_offsets.astype(jnp.int32)

    kernel = _make_kernel(output_size=output_size, num_tasks=num_tasks, tile=tile,
                          tiles_per_core=tiles_per_core,
                          is_deterministic=is_deterministic, fuse_finalize=fuse_finalize)

    def resident(shape):
        return pl.BlockSpec(shape, lambda c, r, offs: (0, 0))

    in_specs = [
        pl.BlockSpec((tile, input_size), lambda c, r, offs: (c * tiles_per_core + r, 0)),
        resident((input_size, h1)),                    # w1
        resident((1, h1)),                             # b1
        resident((h1, h2)),                            # w2
        resident((1, h2)),                             # b2
        resident((h2, output_size)),                   # last_fc W (mu half)
        resident((h2, output_size)),                   # last_fc W (sigma half)
        resident((1, output_size)),                    # last_fc b (mu half)
        resident((1, output_size)),                    # last_fc b (sigma half)
    ]
    args = [row_offsets, h_rows, w1b, b1, w2b, b2, wmub, wsgb, bl_mu, bl_sig]
    if fuse_finalize and not is_deterministic:
        in_specs.append(resident((num_tasks, output_size)))   # eps only when sampling
        args.append(eps)

    if fuse_finalize:
        out_shape = (jax.ShapeDtypeStruct((num_tasks, output_size), jnp.float32),
                     jax.ShapeDtypeStruct((1, 1), jnp.float32))
        out_specs = (pl.BlockSpec((num_tasks, output_size), lambda c, r, offs: (0, 0)),
                     pl.BlockSpec((1, 1), lambda c, r, offs: (0, 0)))
    else:
        out_shape = (jax.ShapeDtypeStruct((num_cores, num_tasks, output_size), jnp.float32),
                     jax.ShapeDtypeStruct((num_cores, num_tasks, output_size), jnp.float32))
        out_specs = (pl.BlockSpec((1, num_tasks, output_size), lambda c, r, offs: (c, 0, 0)),
                     pl.BlockSpec((1, num_tasks, output_size), lambda c, r, offs: (c, 0, 0)))

    flops = int(2 * padded * (input_size * h1 + h1 * h2 + 2 * h2 * output_size)
                + 4 * num_tasks * padded * output_size)
    bytes_accessed = int(sum(int(np.prod(a.shape)) * a.dtype.itemsize for a in args)
                         + 2 * num_tasks * output_size * 4 + 4)
    cost = pl.CostEstimate(flops=flops,
                           transcendentals=int(3 * padded * output_size),
                           bytes_accessed=bytes_accessed)

    outs = pl.pallas_call(
        kernel,
        out_shape=out_shape,
        grid_spec=pltpu.PrefetchScalarGridSpec(
            num_scalar_prefetch=1,
            grid=(num_cores, tiles_per_core),
            in_specs=in_specs,
            out_specs=out_specs,
            scratch_shapes=[pltpu.VMEM((num_tasks, output_size), jnp.float32),
                            pltpu.VMEM((num_tasks, output_size), jnp.float32)],
        ),
        compiler_params=pltpu.CompilerParams(
            dimension_semantics=("parallel", "arbitrary"),   # cores || , row axis reduces
            vmem_limit_bytes=32 * 1024 * 1024,
        ),
        cost_estimate=cost,
    )(*args)

    if fuse_finalize:
        z, kl = outs
        return z, kl[0, 0]

    # Multi-core path: combine per-core partial sums and finalize in plain JAX (tiny).
    p_recip, p_muw = outs
    sum_recip = jnp.sum(p_recip, axis=0)
    sum_muw = jnp.sum(p_muw, axis=0)
    z_var = 1.0 / sum_recip
    z_mean = z_var * sum_muw
    z = z_mean if is_deterministic else z_mean + jnp.sqrt(z_var) * eps
    kl = 0.5 * (jnp.log(sum_recip) + z_var + z_mean * z_mean - 1.0)
    return z, jnp.mean(jnp.sum(kl, axis=-1))


# ---------------------------------------------------------------------------
# Glue / reference
# ---------------------------------------------------------------------------
def select_history_rows(history, num_history, input_size):
    """Mirrors MLPEncoder.forward input handling (static num_history)."""
    if len(num_history) == 1:
        return history
    hist3 = history.reshape(len(num_history), -1, input_size)
    parts = [hist3[i, :max(n, 1)] for i, n in enumerate(num_history)]
    return jnp.concatenate(parts, axis=0)


def build_row_offsets(num_history):
    sizes = [max(n, 1) for n in num_history]
    offs = np.concatenate([[0], np.cumsum(sizes)]).astype(np.int32)
    return jnp.asarray(offs)


def reference_forward(h_rows, params, num_history, eps, *, is_deterministic=False):
    """Pure-jnp reference using the same bf16-matmul / f32-accumulate math."""
    w1, b1, w2, b2, wl_mu, wl_sig, bl_mu, bl_sig = params
    bf, f32 = jnp.bfloat16, jnp.float32
    h = jnp.maximum(jnp.dot(h_rows.astype(bf), w1.astype(bf),
                            preferred_element_type=f32) + b1, 0.0)
    h = jnp.maximum(jnp.dot(h.astype(bf), w2.astype(bf),
                            preferred_element_type=f32) + b2, 0.0)
    hb = h.astype(bf)
    mu = jnp.dot(hb, wl_mu.astype(bf), preferred_element_type=f32) + bl_mu
    sig_pre = jnp.dot(hb, wl_sig.astype(bf), preferred_element_type=f32) + bl_sig
    sig2 = jnp.maximum(_softplus(sig_pre), 1e-7)
    rec = 1.0 / sig2
    z_means, z_vars = [], []
    cnt = 0
    for n in num_history:
        k = max(n, 1)
        sr = jnp.sum(rec[cnt:cnt + k], axis=0)
        sm = jnp.sum((mu * rec)[cnt:cnt + k], axis=0)
        zv = 1.0 / sr
        z_vars.append(zv)
        z_means.append(zv * sm)
        cnt += k
    z_mean = jnp.stack(z_means)
    z_var = jnp.stack(z_vars)
    z = z_mean if is_deterministic else z_mean + jnp.sqrt(z_var) * eps
    kl = -0.5 * jnp.log(z_var) + 0.5 * (z_var + z_mean ** 2) - 0.5
    return z, jnp.mean(jnp.sum(kl, axis=-1))


if __name__ == "__main__":
    # shapes consistent with the module
    input_size = 32          # sar_size
    hidden_sizes = (64, 64)
    output_size = 8          # latent dim
    init_w = 0.003

    key = jax.random.PRNGKey(0)
    ks = jax.random.split(key, 8)

    def uni(k, shape, bound):
        return jax.random.uniform(k, shape, jnp.float32, -bound, bound)

    # deterministic synthetic init mirroring the module's __init__
    hsz1, hsz2 = hidden_sizes
    w1 = uni(ks[0], (input_size, hsz1), 1.0 / np.sqrt(hsz1))   # fanin_init
    b1 = jnp.full((1, hsz1), 0.1, jnp.float32)
    w2 = uni(ks[1], (hsz1, hsz2), 1.0 / np.sqrt(hsz2))
    b2 = jnp.full((1, hsz2), 0.1, jnp.float32)
    w_last = uni(ks[2], (hsz2, 2 * output_size), init_w)       # [mu | sigma] head
    b_last = uni(ks[3], (1, 2 * output_size), init_w)
    # split the fused head once in the wrapper frame (avoids in-kernel lane slicing)
    params = (w1, b1, w2, b2,
              w_last[:, :output_size], w_last[:, output_size:],
              b_last[:, :output_size], b_last[:, output_size:])

    # (num_history, max_seq, row_tile, is_deterministic, num_cores)
    test_cases = [
        ([3, 5], 8, 2048, False, 1),                 # tiny: single step, stochastic rsample
        ([100, 80, 60, 50], 128, 128, True, 1),      # multi-tile reduction + padded rows
        ([100, 80, 60, 50], 128, 128, False, 2),     # dual-core partials + JAX finalize (v7x)
    ]

    for ti, (num_history, max_seq, row_tile, det, cores) in enumerate(test_cases):
        num_tasks = len(num_history)
        kh, ke = jax.random.split(jax.random.fold_in(key, ti))
        history = jax.random.normal(kh, (num_tasks, max_seq * input_size), jnp.float32)
        eps = jax.random.normal(ke, (num_tasks, output_size), jnp.float32)  # rsample noise

        h_rows = select_history_rows(history, num_history, input_size)  # (sum(max(n,1)), in)
        row_offsets = build_row_offsets(num_history)                    # (T+1,) int32

        z, kl = gaussian_encoder_forward(h_rows, params, row_offsets, eps,
                                         is_deterministic=det, row_tile=row_tile,
                                         num_cores=cores)
        z = jax.block_until_ready(z)
        kl = jax.block_until_ready(kl)

        z_ref, kl_ref = reference_forward(h_rows, params, num_history, eps,
                                          is_deterministic=det)
        np.testing.assert_allclose(np.asarray(z), np.asarray(z_ref), rtol=1e-2, atol=1e-2)
        np.testing.assert_allclose(np.asarray(kl), np.asarray(kl_ref), rtol=1e-2, atol=1e-2)

    print("KERNEL_OK")
</pallas_src>

<mosaic_0001>
module attributes {stable_mosaic.version = 11 : i64} {
  func.func @kernel(%arg0: i32, %arg1: i32, %arg2: memref<3xi32, #tpu.memory_space<smem>>, %arg3: memref<8x32xbf16, #tpu.memory_space<vmem>>, %arg4: memref<32x64xbf16, #tpu.memory_space<vmem>>, %arg5: memref<1x64xf32, #tpu.memory_space<vmem>>, %arg6: memref<64x64xbf16, #tpu.memory_space<vmem>>, %arg7: memref<1x64xf32, #tpu.memory_space<vmem>>, %arg8: memref<64x8xbf16, #tpu.memory_space<vmem>>, %arg9: memref<64x8xbf16, #tpu.memory_space<vmem>>, %arg10: memref<1x8xf32, #tpu.memory_space<vmem>>, %arg11: memref<1x8xf32, #tpu.memory_space<vmem>>, %arg12: memref<2x8xf32, #tpu.memory_space<vmem>>, %arg13: memref<2x8xf32, #tpu.memory_space<vmem>>, %arg14: memref<1x1xf32, #tpu.memory_space<vmem>>, %arg15: memref<2x8xf32, #tpu.memory_space<vmem>>, %arg16: memref<2x8xf32, #tpu.memory_space<vmem>>) attributes {dimension_semantics = [#tpu.dimension_semantics<parallel>, #tpu.dimension_semantics<arbitrary>], iteration_bounds = array<i64: 1, 1>, scalar_prefetch = 1 : i64, scratch_operands = 2 : i64, tpu.core_type = #tpu.core_type<tc>, window_params = [{transform_indices = @transform_0, window_bounds = array<i64: 8, 32>}, {pipeline_mode = #tpu.pipeline_mode<synchronous>, transform_indices = @transform_1, window_bounds = array<i64: 32, 64>}, {pipeline_mode = #tpu.pipeline_mode<synchronous>, transform_indices = @transform_2, window_bounds = array<i64: 1, 64>}, {pipeline_mode = #tpu.pipeline_mode<synchronous>, transform_indices = @transform_3, window_bounds = array<i64: 64, 64>}, {pipeline_mode = #tpu.pipeline_mode<synchronous>, transform_indices = @transform_4, window_bounds = array<i64: 1, 64>}, {pipeline_mode = #tpu.pipeline_mode<synchronous>, transform_indices = @transform_5, window_bounds = array<i64: 64, 8>}, {pipeline_mode = #tpu.pipeline_mode<synchronous>, transform_indices = @transform_6, window_bounds = array<i64: 64, 8>}, {pipeline_mode = #tpu.pipeline_mode<synchronous>, transform_indices = @transform_7, window_bounds = array<i64: 1, 8>}, {pipeline_mode = #tpu.pipeline_mode<synchronous>, transform_indices = @transform_8, window_bounds = array<i64: 1, 8>}, {pipeline_mode = #tpu.pipeline_mode<synchronous>, transform_indices = @transform_9, window_bounds = array<i64: 2, 8>}, {pipeline_mode = #tpu.pipeline_mode<synchronous>, transform_indices = @transform_10, window_bounds = array<i64: 2, 8>}, {pipeline_mode = #tpu.pipeline_mode<synchronous>, transform_indices = @transform_11, window_bounds = array<i64: 1, 1>}]} {
    %c0_i32 = arith.constant 0 : i32
    %0 = arith.cmpi eq, %arg1, %c0_i32 : i32
    %1 = arith.extui %0 : i1 to i32
    %c0_i32_0 = arith.constant 0 : i32
    %2 = arith.cmpi ne, %1, %c0_i32_0 : i32
    scf.if %2 {
      %cst_43 = arith.constant 0.000000e+00 : f32
      %79 = vector.broadcast %cst_43 : f32 to vector<2x8xf32>
      %c0_44 = arith.constant 0 : index
      %c0_45 = arith.constant 0 : index
      %80 = vector.load %arg15[%c0_44, %c0_45] : memref<2x8xf32, #tpu.memory_space<vmem>>, vector<2x8xf32>
      tpu.vector_store %arg15[%c0_44, %c0_45], %79 {strides = array<i32>} : memref<2x8xf32, #tpu.memory_space<vmem>>, vector<2x8xf32>,
      %cst_46 = arith.constant 0.000000e+00 : f32
      %81 = vector.broadcast %cst_46 : f32 to vector<2x8xf32>
      %c0_47 = arith.constant 0 : index
      %c0_48 = arith.constant 0 : index
      %82 = vector.load %arg16[%c0_47, %c0_48] : memref<2x8xf32, #tpu.memory_space<vmem>>, vector<2x8xf32>
      tpu.vector_store %arg16[%c0_47, %c0_48], %81 {strides = array<i32>} : memref<2x8xf32, #tpu.memory_space<vmem>>, vector<2x8xf32>,
    } else {
    }
    %c0 = arith.constant 0 : index
    %c0_1 = arith.constant 0 : index
    %3 = vector.load %arg3[%c0, %c0_1] : memref<8x32xbf16, #tpu.memory_space<vmem>>, vector<8x32xbf16>
    %c0_2 = arith.constant 0 : index
    %c0_3 = arith.constant 0 : index
    %4 = vector.load %arg4[%c0_2, %c0_3] : memref<32x64xbf16, #tpu.memory_space<vmem>>, vector<32x64xbf16>
    %cst = arith.constant dense<0.000000e+00> : vector<8x64xf32>
    %5 = tpu.matmul %3, %4, %cst {dimension_numbers = #tpu.dot_dimension_numbers<[1], [0], [0], [1], [0, 0, 1, 1], [], []>} : vector<8x32xbf16>, vector<32x64xbf16>, vector<8x64xf32> -> vector<8x64xf32>
    %c0_4 = arith.constant 0 : index
    %c0_5 = arith.constant 0 : index
    %6 = vector.load %arg5[%c0_4, %c0_5] : memref<1x64xf32, #tpu.memory_space<vmem>>, vector<1x64xf32>
    %7 = vector.broadcast %6 : vector<1x64xf32> to vector<8x64xf32>
    %8 = arith.addf %5, %7 : vector<8x64xf32>
    %cst_6 = arith.constant 0.000000e+00 : f32
    %9 = vector.broadcast %cst_6 : f32 to vector<8x64xf32>
    %10 = arith.maximumf %8, %9 : vector<8x64xf32>
    %11 = arith.truncf %10 : vector<8x64xf32> to vector<8x64xbf16>
    %c0_7 = arith.constant 0 : index
    %c0_8 = arith.constant 0 : index
    %12 = vector.load %arg6[%c0_7, %c0_8] : memref<64x64xbf16, #tpu.memory_space<vmem>>, vector<64x64xbf16>
    %cst_9 = arith.constant dense<0.000000e+00> : vector<8x64xf32>
    %13 = tpu.matmul %11, %12, %cst_9 {dimension_numbers = #tpu.dot_dimension_numbers<[1], [0], [0], [1], [0, 0, 1, 1], [], []>} : vector<8x64xbf16>, vector<64x64xbf16>, vector<8x64xf32> -> vector<8x64xf32>
    %c0_10 = arith.constant 0 : index
    %c0_11 = arith.constant 0 : index
    %14 = vector.load %arg7[%c0_10, %c0_11] : memref<1x64xf32, #tpu.memory_space<vmem>>, vector<1x64xf32>
    %15 = vector.broadcast %14 : vector<1x64xf32> to vector<8x64xf32>
    %16 = arith.addf %13, %15 : vector<8x64xf32>
    %cst_12 = arith.constant 0.000000e+00 : f32
    %17 = vector.broadcast %cst_12 : f32 to vector<8x64xf32>
    %18 = arith.maximumf %16, %17 : vector<8x64xf32>
    %19 = arith.truncf %18 : vector<8x64xf32> to vector<8x64xbf16>
    %c0_13 = arith.constant 0 : index
    %c0_14 = arith.constant 0 : index
    %20 = vector.load %arg8[%c0_13, %c0_14] : memref<64x8xbf16, #tpu.memory_space<vmem>>, vector<64x8xbf16>
    %cst_15 = arith.constant dense<0.000000e+00> : vector<8x8xf32>
    %21 = tpu.matmul %19, %20, %cst_15 {dimension_numbers = #tpu.dot_dimension_numbers<[1], [0], [0], [1], [0, 0, 1, 1], [], []>} : vector<8x64xbf16>, vector<64x8xbf16>, vector<8x8xf32> -> vector<8x8xf32>
    %c0_16 = arith.constant 0 : index
    %c0_17 = arith.constant 0 : index
    %22 = vector.load %arg10[%c0_16, %c0_17] : memref<1x8xf32, #tpu.memory_space<vmem>>, vector<1x8xf32>
    %23 = vector.broadcast %22 : vector<1x8xf32> to vector<8x8xf32>
    %24 = arith.addf %21, %23 : vector<8x8xf32>
    %c0_18 = arith.constant 0 : index
    %c0_19 = arith.constant 0 : index
    %25 = vector.load %arg9[%c0_18, %c0_19] : memref<64x8xbf16, #tpu.memory_space<vmem>>, vector<64x8xbf16>
    %cst_20 = arith.constant dense<0.000000e+00> : vector<8x8xf32>
    %26 = tpu.matmul %19, %25, %cst_20 {dimension_numbers = #tpu.dot_dimension_numbers<[1], [0], [0], [1], [0, 0, 1, 1], [], []>} : vector<8x64xbf16>, vector<64x8xbf16>, vector<8x8xf32> -> vector<8x8xf32>
    %c0_21 = arith.constant 0 : index
    %c0_22 = arith.constant 0 : index
    %27 = vector.load %arg11[%c0_21, %c0_22] : memref<1x8xf32, #tpu.memory_space<vmem>>, vector<1x8xf32>
    %28 = vector.broadcast %27 : vector<1x8xf32> to vector<8x8xf32>
    %29 = arith.addf %26, %28 : vector<8x8xf32>
    %cst_23 = arith.constant 0.000000e+00 : f32
    %30 = vector.broadcast %cst_23 : f32 to vector<8x8xf32>
    %31 = arith.maximumf %29, %30 : vector<8x8xf32>
    %32 = math.absf %29 : vector<8x8xf32>
    %cst_24 = arith.constant 0.000000e+00 : f32
    %33 = vector.broadcast %cst_24 : f32 to vector<8x8xf32>
    %34 = arith.subf %33, %32 : vector<8x8xf32>
    %35 = math.exp %34 : vector<8x8xf32>
    %cst_25 = arith.constant 1.000000e+00 : f32
    %36 = vector.broadcast %cst_25 : f32 to vector<8x8xf32>
    %37 = arith.addf %36, %35 : vector<8x8xf32>
    %38 = math.log %37 : vector<8x8xf32>
    %39 = arith.addf %31, %38 : vector<8x8xf32>
    %cst_26 = arith.constant 1.000000e-07 : f32
    %40 = vector.broadcast %cst_26 : f32 to vector<8x8xf32>
    %41 = arith.maximumf %39, %40 : vector<8x8xf32>
    %cst_27 = arith.constant 1.000000e+00 : f32
    %42 = vector.broadcast %cst_27 : f32 to vector<8x8xf32>
    %43 = arith.divf %42, %41 : vector<8x8xf32>
    %c1_i32 = arith.constant 1 : i32
    %44 = arith.muli %arg0, %c1_i32 : i32
    %45 = arith.addi %44, %arg1 : i32
    %c8_i32 = arith.constant 8 : i32
    %46 = arith.muli %45, %c8_i32 : i32
    %47 = tpu.iota {dimensions = array<i32: 1>} : vector<1x8xi32>
    %48 = vector.broadcast %46 : i32 to vector<1x8xi32>
    %49 = arith.addi %48, %47 : vector<1x8xi32>
    %c0_i32_28 = arith.constant 0 : i32
    %50 = vector.broadcast %c0_i32_28 : i32 to vector<1x8xi32>
    %c1 = arith.constant 1 : index
    %51 = memref.load %arg2[%c1] : memref<3xi32, #tpu.memory_space<smem>>
    %52 = vector.broadcast %51 : i32 to vector<1x8xi32>
    %53 = arith.cmpi sge, %49, %52 : vector<1x8xi32>
    %54 = arith.extui %53 : vector<1x8xi1> to vector<1x8xi32>
    %55 = arith.addi %50, %54 : vector<1x8xi32>
    %c2 = arith.constant 2 : index
    %56 = memref.load %arg2[%c2] : memref<3xi32, #tpu.memory_space<smem>>
    %57 = vector.broadcast %56 : i32 to vector<1x8xi32>
    %58 = arith.cmpi slt, %49, %57 : vector<1x8xi32>
    %59 = tpu.iota {dimensions = array<i32: 0>} : vector<2x8xi32>
    %60 = vector.broadcast %55 : vector<1x8xi32> to vector<2x8xi32>
    %61 = arith.cmpi eq, %60, %59 : vector<2x8xi32>
    %62 = vector.broadcast %58 : vector<1x8xi1> to vector<2x8xi1>
    %63 = arith.andi %61, %62 : vector<2x8xi1>
    %cst_29 = arith.constant 1.000000e+00 : f32
    %cst_30 = arith.constant 0.000000e+00 : f32
    %64 = vector.broadcast %cst_29 : f32 to vector<2x8xf32>
    %65 = vector.broadcast %cst_30 : f32 to vector<2x8xf32>
    %66 = arith.select %63, %64, %65 : vector<2x8xi1>, vector<2x8xf32>
    %c0_31 = arith.constant 0 : index
    %c0_32 = arith.constant 0 : index
    %67 = vector.load %arg15[%c0_31, %c0_32] : memref<2x8xf32, #tpu.memory_space<vmem>>, vector<2x8xf32>
    %cst_33 = arith.constant dense<0.000000e+00> : vector<2x8xf32>
    %68 = tpu.matmul %66, %43, %cst_33 {dimension_numbers = #tpu.dot_dimension_numbers<[1], [0], [0], [1], [0, 0, 1, 1], [], []>} : vector<2x8xf32>, vector<8x8xf32>, vector<2x8xf32> -> vector<2x8xf32>
    %69 = arith.addf %67, %68 : vector<2x8xf32>
    %c0_34 = arith.constant 0 : index
    %c0_35 = arith.constant 0 : index
    %70 = vector.load %arg15[%c0_34, %c0_35] : memref<2x8xf32, #tpu.memory_space<vmem>>, vector<2x8xf32>
    tpu.vector_store %arg15[%c0_34, %c0_35], %69 {strides = array<i32>} : memref<2x8xf32, #tpu.memory_space<vmem>>, vector<2x8xf32>,
    %c0_36 = arith.constant 0 : index
    %c0_37 = arith.constant 0 : index
    %71 = vector.load %arg16[%c0_36, %c0_37] : memref<2x8xf32, #tpu.memory_space<vmem>>, vector<2x8xf32>
    %72 = arith.mulf %24, %43 : vector<8x8xf32>
    %cst_38 = arith.constant dense<0.000000e+00> : vector<2x8xf32>
    %73 = tpu.matmul %66, %72, %cst_38 {dimension_numbers = #tpu.dot_dimension_numbers<[1], [0], [0], [1], [0, 0, 1, 1], [], []>} : vector<2x8xf32>, vector<8x8xf32>, vector<2x8xf32> -> vector<2x8xf32>
    %74 = arith.addf %71, %73 : vector<2x8xf32>
    %c0_39 = arith.constant 0 : index
    %c0_40 = arith.constant 0 : index
    %75 = vector.load %arg16[%c0_39, %c0_40] : memref<2x8xf32, #tpu.memory_space<vmem>>, vector<2x8xf32>
    tpu.vector_store %arg16[%c0_39, %c0_40], %74 {strides = array<i32>} : memref<2x8xf32, #tpu.memory_space<vmem>>, vector<2x8xf32>,
    %c0_i32_41 = arith.constant 0 : i32
    %76 = arith.cmpi eq, %arg1, %c0_i32_41 : i32
    %77 = arith.extui %76 : i1 to i32
    %c0_i32_42 = arith.constant 0 : i32
    %78 = arith.cmpi ne, %77, %c0_i32_42 : i32
    scf.if %78 {
      %c0_43 = arith.constant 0 : index
      %c0_44 = arith.constant 0 : index
      %79 = vector.load %arg15[%c0_43, %c0_44] : memref<2x8xf32, #tpu.memory_space<vmem>>, vector<2x8xf32>
      %c0_45 = arith.constant 0 : index
      %c0_46 = arith.constant 0 : index
      %80 = vector.load %arg16[%c0_45, %c0_46] : memref<2x8xf32, #tpu.memory_space<vmem>>, vector<2x8xf32>
      %cst_47 = arith.constant 1.000000e+00 : f32
      %81 = vector.broadcast %cst_47 : f32 to vector<2x8xf32>
      %82 = arith.divf %81, %79 : vector<2x8xf32>
      %83 = arith.mulf %82, %80 : vector<2x8xf32>
      %84 = math.sqrt %82 : vector<2x8xf32>
      %c0_48 = arith.constant 0 : index
      %c0_49 = arith.constant 0 : index
      %85 = vector.load %arg12[%c0_48, %c0_49] : memref<2x8xf32, #tpu.memory_space<vmem>>, vector<2x8xf32>
      %86 = arith.mulf %84, %85 : vector<2x8xf32>
      %87 = arith.addf %83, %86 : vector<2x8xf32>
      %c0_50 = arith.constant 0 : index
      %c0_51 = arith.constant 0 : index
      %88 = vector.load %arg13[%c0_50, %c0_51] : memref<2x8xf32, #tpu.memory_space<vmem>>, vector<2x8xf32>
      tpu.vector_store %arg13[%c0_50, %c0_51], %87 {strides = array<i32>} : memref<2x8xf32, #tpu.memory_space<vmem>>, vector<2x8xf32>,
      %89 = math.log %79 : vector<2x8xf32>
      %90 = arith.addf %89, %82 : vector<2x8xf32>
      %91 = arith.mulf %83, %83 : vector<2x8xf32>
      %92 = arith.addf %90, %91 : vector<2x8xf32>
      %cst_52 = arith.constant 1.000000e+00 : f32
      %93 = vector.broadcast %cst_52 : f32 to vector<2x8xf32>
      %94 = arith.subf %92, %93 : vector<2x8xf32>
      %cst_53 = arith.constant 5.000000e-01 : f32
      %95 = vector.broadcast %cst_53 : f32 to vector<2x8xf32>
      %96 = arith.mulf %95, %94 : vector<2x8xf32>
      %cst_54 = arith.constant dense<0.000000e+00> : vector<2xf32>
      %97 = vector.multi_reduction <add>, %96, %cst_54 [1] : vector<2x8xf32> to vector<2xf32>
      %98 = vector.shape_cast %97 : vector<2xf32> to vector<2x1xf32>
      %cst_55 = arith.constant dense<0.000000e+00> : vector<1xf32>
      %99 = vector.multi_reduction <add>, %98, %cst_55 [0] : vector<2x1xf32> to vector<1xf32>
      %100 = vector.shape_cast %99 : vector<1xf32> to vector<1x1xf32>
      %cst_56 = arith.constant 2.000000e+00 : f32
      %101 = vector.broadcast %cst_56 : f32 to vector<1x1xf32>
      %102 = arith.divf %100, %101 : vector<1x1xf32>
      %c0_57 = arith.constant 0 : index
      %c0_58 = arith.constant 0 : index
      %103 = vector.load %arg14[%c0_57, %c0_58] : memref<1x1xf32, #tpu.memory_space<vmem>>, vector<1x1xf32>
      tpu.vector_store %arg14[%c0_57, %c0_58], %102 {strides = array<i32>} : memref<1x1xf32, #tpu.memory_space<vmem>>, vector<1x1xf32>,
    } else {
    }
    return
  }
  func.func @transform_0(%arg0: i32, %arg1: i32, %arg2: memref<3xi32, #tpu.memory_space<smem>>) -> (i32, i32) {
    %c1_i32 = arith.constant 1 : i32
    %0 = arith.muli %arg0, %c1_i32 : i32
    %1 = arith.addi %0, %arg1 : i32
    %c0_i32 = arith.constant 0 : i32
    %c0_i32_0 = arith.constant 0 : i32
    return %1, %c0_i32 : i32, i32
  }
  func.func @transform_1(%arg0: i32, %arg1: i32, %arg2: memref<3xi32, #tpu.memory_space<smem>>) -> (i32, i32) {
    %c0_i32 = arith.constant 0 : i32
    %c0_i32_0 = arith.constant 0 : i32
    %c0_i32_1 = arith.constant 0 : i32
    return %c0_i32, %c0_i32_0 : i32, i32
  }
  func.func @transform_2(%arg0: i32, %arg1: i32, %arg2: memref<3xi32, #tpu.memory_space<smem>>) -> (i32, i32) {
    %c0_i32 = arith.constant 0 : i32
    %c0_i32_0 = arith.constant 0 : i32
    %c0_i32_1 = arith.constant 0 : i32
    return %c0_i32, %c0_i32_0 : i32, i32
  }
  func.func @transform_3(%arg0: i32, %arg1: i32, %arg2: memref<3xi32, #tpu.memory_space<smem>>) -> (i32, i32) {
    %c0_i32 = arith.constant 0 : i32
    %c0_i32_0 = arith.constant 0 : i32
    %c0_i32_1 = arith.constant 0 : i32
    return %c0_i32, %c0_i32_0 : i32, i32
  }
  func.func @transform_4(%arg0: i32, %arg1: i32, %arg2: memref<3xi32, #tpu.memory_space<smem>>) -> (i32, i32) {
    %c0_i32 = arith.constant 0 : i32
    %c0_i32_0 = arith.constant 0 : i32
    %c0_i32_1 = arith.constant 0 : i32
    return %c0_i32, %c0_i32_0 : i32, i32
  }
  func.func @transform_5(%arg0: i32, %arg1: i32, %arg2: memref<3xi32, #tpu.memory_space<smem>>) -> (i32, i32) {
    %c0_i32 = arith.constant 0 : i32
    %c0_i32_0 = arith.constant 0 : i32
    %c0_i32_1 = arith.constant 0 : i32
    return %c0_i32, %c0_i32_0 : i32, i32
  }
  func.func @transform_6(%arg0: i32, %arg1: i32, %arg2: memref<3xi32, #tpu.memory_space<smem>>) -> (i32, i32) {
    %c0_i32 = arith.constant 0 : i32
    %c0_i32_0 = arith.constant 0 : i32
    %c0_i32_1 = arith.constant 0 : i32
    return %c0_i32, %c0_i32_0 : i32, i32
  }
  func.func @transform_7(%arg0: i32, %arg1: i32, %arg2: memref<3xi32, #tpu.memory_space<smem>>) -> (i32, i32) {
    %c0_i32 = arith.constant 0 : i32
    %c0_i32_0 = arith.constant 0 : i32
    %c0_i32_1 = arith.constant 0 : i32
    return %c0_i32, %c0_i32_0 : i32, i32
  }
  func.func @transform_8(%arg0: i32, %arg1: i32, %arg2: memref<3xi32, #tpu.memory_space<smem>>) -> (i32, i32) {
    %c0_i32 = arith.constant 0 : i32
    %c0_i32_0 = arith.constant 0 : i32
    %c0_i32_1 = arith.constant 0 : i32
    return %c0_i32, %c0_i32_0 : i32, i32
  }
  func.func @transform_9(%arg0: i32, %arg1: i32, %arg2: memref<3xi32, #tpu.memory_space<smem>>) -> (i32, i32) {
    %c0_i32 = arith.constant 0 : i32
    %c0_i32_0 = arith.constant 0 : i32
    %c0_i32_1 = arith.constant 0 : i32
    return %c0_i32, %c0_i32_0 : i32, i32
  }
  func.func @transform_10(%arg0: i32, %arg1: i32, %arg2: memref<3xi32, #tpu.memory_space<smem>>) -> (i32, i32) {
    %c0_i32 = arith.constant 0 : i32
    %c0_i32_0 = arith.constant 0 : i32
    %c0_i32_1 = arith.constant 0 : i32
    return %c0_i32, %c0_i32_0 : i32, i32
  }
  func.func @transform_11(%arg0: i32, %arg1: i32, %arg2: memref<3xi32, #tpu.memory_space<smem>>) -> (i32, i32) {
    %c0_i32 = arith.constant 0 : i32
    %c0_i32_0 = arith.constant 0 : i32
    %c0_i32_1 = arith.constant 0 : i32
    return %c0_i32, %c0_i32_0 : i32, i32
  }
}

</mosaic_0001>

<llo_original>
// kernel: tpu_custom_call.1
$region0: #{tpu_custom_call.1}
  #allocation0 [shape = 'u32[]', space=smem, size = 0x4, offset = 0x4, fixed_abs, tag = 'smem constant byte address 0x4 - core index']
  #allocation1 [shape = 'u32[72,128]{1,0:T(1,128)}', space=vmem, size = 0x9000, scoped, tag = 'internal scratch']
  #allocation2 [shape = 'f32[2,8]{1,0:T(2,128)}', space=vmem, size = 0x400, scoped, tag = 'scratch operand']
  #allocation3 [shape = 'f32[2,8]{1,0:T(2,128)}', space=vmem, size = 0x400, scoped, tag = 'scratch operand']
  #allocation4 [shape = 's32[1]{0}', space=sflag, size = 0x4, scoped, tag = 'scoped memory for tpu_custom_call.1']
  #allocation5 [shape = 'u8[512]{0}', space=smem, size = 0x200, scoped, tag = 'prefetched SMEM operand 0']
  %s0 = inlined_call_operand.vmem [shape: s32[3], index: 0, kind: input, shape index: {}]
  %s1 = inlined_call_operand.vmem [shape: bf16[8,32], index: 1, kind: input, shape index: {}]
  %s2 = inlined_call_operand.vmem [shape: bf16[32,64], index: 2, kind: input, shape index: {}]
  %s3 = inlined_call_operand.vmem [shape: f32[1,64], index: 3, kind: input, shape index: {}]
  %s4 = inlined_call_operand.vmem [shape: bf16[64,64], index: 4, kind: input, shape index: {}]
  %s5 = inlined_call_operand.vmem [shape: f32[1,64], index: 5, kind: input, shape index: {}]
  %s6 = inlined_call_operand.vmem [shape: bf16[64,8], index: 6, kind: input, shape index: {}]
  %s7 = inlined_call_operand.vmem [shape: bf16[64,8], index: 7, kind: input, shape index: {}]
  %s8 = inlined_call_operand.vmem [shape: f32[1,8], index: 8, kind: input, shape index: {}]
  %s9 = inlined_call_operand.vmem [shape: f32[1,8], index: 9, kind: input, shape index: {}]
  %s10 = inlined_call_operand.vmem [shape: f32[2,8], index: 10, kind: input, shape index: {}]
  %s11 = inlined_call_operand.hbm [shape: f32[2,8], index: 11, kind: output, shape index: {0}]
  %s12 = inlined_call_operand.hbm [shape: f32[1,1], index: 12, kind: output, shape index: {1}]
  %13 = xla_tuple %s11, %s12
  %s14 = sld [smem:[#allocation0]]
  $region66: #{tpu_custom_call.1} parent=0
    _
  %s16 = ssub.s32 1, %s14
  %s17 = scalar_select 0, %s16, %s14
  %s19 = sshll.u32 %s0, 4
  %s20 = int_to_ptr.vmem [resolvable:$true] %s19
  %22 = dma.vmem_to_smem %s20, 16, [#allocation5], [#allocation4]
  %24 = dma.done [#allocation4], 16
  %25 = sfence
  $region1: #{tpu_custom_call.1} parent=0
    #allocation6 [shape = 'u8[1024]{0}', space=vmem, size = 0x400, scoped, tag = 'output window, operand 0, single buffered']
    #allocation7 [shape = 's32[1]{0}', space=sflag, size = 0x4, scoped, tag = 'scoped memory for tpu_custom_call.1']
    #allocation8 [shape = 'u8[512]{0}', space=vmem, size = 0x400, scoped, tag = 'output window, operand 1, single buffered']
    #allocation9 [shape = 's32[1]{0}', space=sflag, size = 0x4, scoped, tag = 'scoped memory for tpu_custom_call.1']
    %26 = vsyncpa [#allocation7], 0
    %27 = vsyncpa [#allocation9], 0
    // Predicated region
    $region2: #{tpu_custom_call.1} parent=1 // pred_check
      _
    $region3: #{tpu_custom_call.1} parent=1 // pred_check_branch
      %29 = sbr.rel (0) target = $region5
    $region4: #{tpu_custom_call.1} parent=1 // pred_region
      %s30 = sadd.s32 0, 0
      %p31 = scmp.lt.s32.totalorder %s30, 0
      %s32 = scalar_select %p31, %s30, 0
      %s33 = smul.addr %s32, 4
      %s34 = scalar_lea.vmem %s1, %s33
      %s35 = sadd.s32 0, 0
    $region5: #{tpu_custom_call.1} parent=1 // pred_fallthru
      _
    // Predicated region
    $region6: #{tpu_custom_call.1} parent=1 // pred_check
      _
    $region7: #{tpu_custom_call.1} parent=1 // pred_check_branch
      %37 = sbr.rel (0) target = $region9
    $region8: #{tpu_custom_call.1} parent=1 // pred_region
      _
    $region9: #{tpu_custom_call.1} parent=1 // pred_fallthru
      _
    // Predicated region
    $region10: #{tpu_custom_call.1} parent=1 // pred_check
      _
    $region11: #{tpu_custom_call.1} parent=1 // pred_check_branch
      %39 = sbr.rel (0) target = $region13
    $region12: #{tpu_custom_call.1} parent=1 // pred_region
      _
    $region13: #{tpu_custom_call.1} parent=1 // pred_fallthru
      _
    // Predicated region
    $region14: #{tpu_custom_call.1} parent=1 // pred_check
      _
    $region15: #{tpu_custom_call.1} parent=1 // pred_check_branch
      %41 = sbr.rel (0) target = $region17
    $region16: #{tpu_custom_call.1} parent=1 // pred_region
      _
    $region17: #{tpu_custom_call.1} parent=1 // pred_fallthru
      _
    // Predicated region
    $region18: #{tpu_custom_call.1} parent=1 // pred_check
      _
    $region19: #{tpu_custom_call.1} parent=1 // pred_check_branch
      %43 = sbr.rel (0) target = $region21
    $region20: #{tpu_custom_call.1} parent=1 // pred_region
      _
    $region21: #{tpu_custom_call.1} parent=1 // pred_fallthru
      _
    // Predicated region
    $region22: #{tpu_custom_call.1} parent=1 // pred_check
      _
    $region23: #{tpu_custom_call.1} parent=1 // pred_check_branch
      %45 = sbr.rel (0) target = $region25
    $region24: #{tpu_custom_call.1} parent=1 // pred_region
      _
    $region25: #{tpu_custom_call.1} parent=1 // pred_fallthru
      _
    // Predicated region
    $region26: #{tpu_custom_call.1} parent=1 // pred_check
      _
    $region27: #{tpu_custom_call.1} parent=1 // pred_check_branch
      %47 = sbr.rel (0) target = $region29
    $region28: #{tpu_custom_call.1} parent=1 // pred_region
      _
    $region29: #{tpu_custom_call.1} parent=1 // pred_fallthru
      _
    // Predicated region
    $region30: #{tpu_custom_call.1} parent=1 // pred_check
      _
    $region31: #{tpu_custom_call.1} parent=1 // pred_check_branch
      %49 = sbr.rel (0) target = $region33
    $region32: #{tpu_custom_call.1} parent=1 // pred_region
      _
    $region33: #{tpu_custom_call.1} parent=1 // pred_fallthru
      _
    // Predicated region
    $region34: #{tpu_custom_call.1} parent=1 // pred_check
      _
    $region35: #{tpu_custom_call.1} parent=1 // pred_check_branch
      %51 = sbr.rel (0) target = $region37
    $region36: #{tpu_custom_call.1} parent=1 // pred_region
      _
    $region37: #{tpu_custom_call.1} parent=1 // pred_fallthru
      _
    // Predicated region
    $region38: #{tpu_custom_call.1} parent=1 // pred_check
      _
    $region39: #{tpu_custom_call.1} parent=1 // pred_check_branch
      %53 = sbr.rel (0) target = $region41
    $region40: #{tpu_custom_call.1} parent=1 // pred_region
      _
    $region41: #{tpu_custom_call.1} parent=1 // pred_fallthru
      _
    %s54 = sadd.s32 0, 0
    %p55 = scmp.lt.s32.totalorder %s54, 0
    %s56 = scalar_select %p55, %s54, 0
    %s57 = smul.addr %s56, 4
    %s58 = scalar_lea.vmem %s1, %s57
    %s59 = sadd.s32 0, 0
    %p60 = scmp.lt.s32.totalorder %s59, 0
    %s61 = scalar_select %p60, %s59, 0
    %s62 = smul.addr %s61, 4
    %s63 = scalar_lea.vmem %s1, %s62
    %s64 = sadd.s32 0, 0
    %p66 = scmp.eq.s32.totalorder 0, 0
    // Predicated region
    $region42: #{tpu_custom_call.1} parent=1 // pred_check
      %p67 = pneg %p66
    $region43: #{tpu_custom_call.1} parent=1 // pred_check_branch
      %69 = sbr.rel (%p67) target = $region45
    $region44: #{tpu_custom_call.1} parent=1 // pred_region
      %vm70 = vcmask 58368
      %71 = vst.msk [vmem:[#allocation2] sm:$0x3] %vm70, 0.0
      %72 = vst.msk [vmem:[#allocation3] sm:$0x3] %vm70, 0.0
    $region45: #{tpu_custom_call.1} parent=1 // pred_fallthru
      _
    %v73 = vld [vmem:[%s63] sm:$0xf]
    %v74 = vld [vmem:[%s2] sm:$0xf]
    %v75 = vld [vmem:[%s2 + $0x4] sm:$0xf]
    %v76 = vld [vmem:[%s2 + $0x8] sm:$0xf]
    %v77 = vld [vmem:[%s2 + $0xc] sm:$0xf]
    %v78 = vld [vmem:[%s3] sm:$0x1]
    %v80 = vperm.slane %v78, 0
    %v86 = vunpack.c.l.b16 %v74
    %v87 = vunpack.c.l.b16 %v75
    %v88 = vunpack.c.l.b16 %v76
    %v89 = vunpack.c.l.b16 %v77
    %v90 = vpack.c.b16 %v87, %v86
    %v91 = vpack.c.b16 %v89, %v88
    %vm94 = vcmask 261120
    %v96 = vsel %vm94, %v73, 0
    %98 = vmatpush.bf16.msra.mxu0 0
    %99 = vmatpush.bf16.msra.mxu0 0
    %100 = vmatpush.bf16.msra.mxu0 0
    %101 = vmatpush.bf16.msra.mxu0 0
    %102 = vmatpush.bf16.msra.mxu0 0
    %103 = vmatpush.bf16.msra.mxu0 0
    %104 = vmatpush.bf16.msra.mxu0 %v91
    %105 = vmatpush.bf16.msra.mxu0 %v90
    %106 = vmatmul.bf16.gmra.mxu0 %v96
    %v107 = vpop.f32.mrf.mxu0
    %v108 = vadd.f32 %v80, %v107
    %v109 = vpop.f32.mrf.mxu0
    %110 = vdwg.mxu0
    %v111 = vmax.f32 %v108, 0.0
    %v112 = vpack.c.bf16 %v111, %v111
    %v113 = vld [vmem:[%s4] sm:$0xf]
    %v114 = vld [vmem:[%s4 + $0x4] sm:$0xf]
    %v115 = vld [vmem:[%s4 + $0x8] sm:$0xf]
    %v116 = vld [vmem:[%s4 + $0xc] sm:$0xf]
    %v117 = vld [vmem:[%s4 + $0x10] sm:$0xf]
    %v118 = vld [vmem:[%s4 + $0x14] sm:$0xf]
    %v119 = vld [vmem:[%s4 + $0x18] sm:$0xf]
    %v120 = vld [vmem:[%s4 + $0x1c] sm:$0xf]
    %v121 = vld [vmem:[%s5] sm:$0x1]
    %v123 = vperm.slane %v121, 0
    %v133 = vunpack.c.l.b16 %v113
    %v134 = vunpack.c.l.b16 %v114
    %v135 = vunpack.c.l.b16 %v115
    %v136 = vunpack.c.l.b16 %v116
    %v137 = vunpack.c.l.b16 %v117
    %v138 = vunpack.c.l.b16 %v118
    %v139 = vunpack.c.l.b16 %v119
    %v140 = vunpack.c.l.b16 %v120
    %v141 = vpack.c.b16 %v134, %v133
    %v142 = vpack.c.b16 %v136, %v135
    %v143 = vpack.c.b16 %v138, %v137
    %v144 = vpack.c.b16 %v140, %v139
    %vm149 = vcmask 523264
    %v151 = vsel %vm149, %v112, 0
    %153 = vmatpush.bf16.msra.mxu0 0
    %154 = vmatpush.bf16.msra.mxu0 0
    %155 = vmatpush.bf16.msra.mxu0 0
    %156 = vmatpush.bf16.msra.mxu0 0
    %157 = vmatpush.bf16.msra.mxu0 %v144
    %158 = vmatpush.bf16.msra.mxu0 %v143
    %159 = vmatpush.bf16.msra.mxu0 %v142
    %160 = vmatpush.bf16.msra.mxu0 %v141
    %161 = vmatmul.bf16.gmra.mxu0 %v151
    %v162 = vpop.f32.mrf.mxu0
    %v163 = vadd.f32 %v123, %v162
    %v164 = vpop.f32.mrf.mxu0
    %165 = vdwg.mxu0
    %v166 = vmax.f32 %v163, 0.0
    %v167 = vpack.c.bf16 %v166, %v166
    %v168 = vld [vmem:[%s6] sm:$0xf]
    %v169 = vld [vmem:[%s6 + $0x4] sm:$0xf]
    %v170 = vld [vmem:[%s6 + $0x8] sm:$0xf]
    %v171 = vld [vmem:[%s6 + $0xc] sm:$0xf]
    %v172 = vld [vmem:[%s6 + $0x10] sm:$0xf]
    %v173 = vld [vmem:[%s6 + $0x14] sm:$0xf]
    %v174 = vld [vmem:[%s6 + $0x18] sm:$0xf]
    %v175 = vld [vmem:[%s6 + $0x1c] sm:$0xf]
    %v176 = vld [vmem:[%s8] sm:$0x1]
    %v178 = vperm.slane %v176, 0
    %v188 = vunpack.c.l.b16 %v168
    %v189 = vunpack.c.l.b16 %v169
    %v190 = vunpack.c.l.b16 %v170
    %v191 = vunpack.c.l.b16 %v171
    %v192 = vunpack.c.l.b16 %v172
    %v193 = vunpack.c.l.b16 %v173
    %v194 = vunpack.c.l.b16 %v174
    %v195 = vunpack.c.l.b16 %v175
    %v196 = vpack.c.b16 %v189, %v188
    %v197 = vpack.c.b16 %v191, %v190
    %v198 = vpack.c.b16 %v193, %v192
    %v199 = vpack.c.b16 %v195, %v194
    %v205 = vsel %vm149, %v167, 0
    %207 = vmatpush.bf16.msra.mxu0 0
    %208 = vmatpush.bf16.msra.mxu0 0
    %209 = vmatpush.bf16.msra.mxu0 0
    %210 = vmatpush.bf16.msra.mxu0 0
    %211 = vmatpush.bf16.msra.mxu0 %v199
    %212 = vmatpush.bf16.msra.mxu0 %v198
    %213 = vmatpush.bf16.msra.mxu0 %v197
    %214 = vmatpush.bf16.msra.mxu0 %v196
    %215 = vmatmul.bf16.gmra.mxu0 %v205
    %v216 = vpop.f32.mrf.mxu0
    %v217 = vadd.f32 %v178, %v216
    %v218 = vpop.f32.mrf.mxu0
    %219 = vdwg.mxu0
    %v220 = vld [vmem:[%s7] sm:$0xf]
    %v221 = vld [vmem:[%s7 + $0x4] sm:$0xf]
    %v222 = vld [vmem:[%s7 + $0x8] sm:$0xf]
    %v223 = vld [vmem:[%s7 + $0xc] sm:$0xf]
    %v224 = vld [vmem:[%s7 + $0x10] sm:$0xf]
    %v225 = vld [vmem:[%s7 + $0x14] sm:$0xf]
    %v226 = vld [vmem:[%s7 + $0x18] sm:$0xf]
    %v227 = vld [vmem:[%s7 + $0x1c] sm:$0xf]
    %v228 = vld [vmem:[%s9] sm:$0x1]
    %v230 = vperm.slane %v228, 0
    %v240 = vunpack.c.l.b16 %v220
    %v241 = vunpack.c.l.b16 %v221
    %v242 = vunpack.c.l.b16 %v222
    %v243 = vunpack.c.l.b16 %v223
    %v244 = vunpack.c.l.b16 %v224
    %v245 = vunpack.c.l.b16 %v225
    %v246 = vunpack.c.l.b16 %v226
    %v247 = vunpack.c.l.b16 %v227
    %v248 = vpack.c.b16 %v241, %v240
    %v249 = vpack.c.b16 %v243, %v242
    %v250 = vpack.c.b16 %v245, %v244
    %v251 = vpack.c.b16 %v247, %v246
    %256 = vmatpush.bf16.msra.mxu0 0
    %257 = vmatpush.bf16.msra.mxu0 0
    %258 = vmatpush.bf16.msra.mxu0 0
    %259 = vmatpush.bf16.msra.mxu0 0
    %260 = vmatpush.bf16.msra.mxu0 %v251
    %261 = vmatpush.bf16.msra.mxu0 %v250
    %262 = vmatpush.bf16.msra.mxu0 %v249
    %263 = vmatpush.bf16.msra.mxu0 %v248
    %264 = vmatmul.bf16.gmra.mxu0 %v205
    %v265 = vpop.f32.mrf.mxu0
    %v266 = vadd.f32 %v230, %v265
    %v267 = vpop.f32.mrf.mxu0
    %268 = vdwg.mxu0
    %v269 = vmax.f32 %v266, 0.0
    %v270 = vand.u32 2147483647, %v266
    %v271 = vsub.f32 0.0, %v270
    %v272 = vmul.f32 %v271, 1.442695
    %v273 = vpow.pop %v272
    %v274 = vadd.f32 %v273, 1.0
    %v275 = vlog2.pop %v274
    %v276 = vmul.f32 %v275, 0.6931472
    %v277 = vadd.f32 %v269, %v276
    %v278 = vmax.f32 %v277, 1e-07
    %v279 = vrcp.pop %v278
    %v280 = vmul.f32 %v278, %v279
    %v281 = vsub.f32 1.0, %v280
    %v282 = vmul.f32 %v279, %v281
    %v283 = vadd.f32 %v279, %v282
    %vm284 = vweird.f32 %v278
    %vm285 = vweird.f32 %v279
    %vm286 = vmor %vm284, %vm285
    %v287 = vsel %vm286, %v279, %v283
    %v288 = vand.u32 2147483647, %v278
    %vm289 = vcmp.eq.f32.partialorder %v288, 8.507059e+37
    %v290 = vand.u32 %v278, 2147483648
    %v291 = vor.u32 1.1754944e-38, %v290
    %v292 = vsel %vm289, %v291, %v287
    %v293 = vmul.f32 1.0, %v292
    %s294 = sadd.s32 0, 0
    %s295 = smul.u32 %s294, 8
    %v296 = vlaneseq
    %v297 = vand.u32 %v296, 127
    %v298 = vstv %s295
    %v299 = vadd.s32 %v298, %v297
    %s300 = sld [smem:[#allocation5 + $0x1]]
    %v301 = vstv %s300
    %vm302 = vcmp.ge.s32.totalorder %v299, %v301
    %v303 = vsel %vm302, 1, 0
    %s304 = sld [smem:[#allocation5 + $0x2]]
    %v305 = vstv %s304
    %vm306 = vcmp.lt.s32.totalorder %v299, %v305
    %v307 = vlaneseq
    %v308 = vshrl.u32 %v307, 7
    %vm309 = vcmp.eq.s32.totalorder %v303, %v308
    %v310 = vsel %vm306, 1, 0
    %vm311 = vcmp.eq.s32.totalorder %v310, 1
    %vm312 = vmand %vm309, %vm311
    %v313 = vsel %vm312, 1.0, 0.0
    %v314 = vld [vmem:[#allocation2] sm:$0x3]
    %vm315 = vcmask 64512
    %v317 = vsel %vm315, %v313, 0
    %319 = vmatpush.msra.mxu0 0.0
    %320 = vmatpush.msra.mxu0 0.0
    %321 = vmatpush.msra.mxu0 0.0
    %322 = vmatpush.msra.mxu0 0.0
    %323 = vmatpush.msra.mxu0 0.0
    %324 = vmatpush.msra.mxu0 0.0
    %325 = vmatpush.msra.mxu0 0.0
    %326 = vmatpush.msra.mxu0 0.0
    %327 = vmatpush.msra.mxu0 0.0
    %328 = vmatpush.msra.mxu0 0.0
    %329 = vmatpush.msra.mxu0 0.0
    %330 = vmatpush.msra.mxu0 0.0
    %331 = vmatpush.msra.mxu0 0.0
    %332 = vmatpush.msra.mxu0 0.0
    %333 = vmatpush.msra.mxu0 0.0
    %334 = vmatpush.msra.mxu0 %v293
    %335 = vmatmul.f32.gmra.mxu0 %v317
    %v336 = vpop.f32.mrf.mxu0
    %v337 = vadd.f32 0.0, %v336
    %338 = vdwg.mxu0
    %v339 = vadd.f32 %v314, %v337
    %vm340 = vcmask 58368
    %341 = vst.msk [vmem:[#allocation2] sm:$0x3] %vm340, %v339
    %v342 = vld [vmem:[#allocation3] sm:$0x3]
    %v343 = vmul.f32 %v217, %v293
    %344 = vmatpush.msra.mxu0 0.0
    %345 = vmatpush.msra.mxu0 0.0
    %346 = vmatpush.msra.mxu0 0.0
    %347 = vmatpush.msra.mxu0 0.0
    %348 = vmatpush.msra.mxu0 0.0
    %349 = vmatpush.msra.mxu0 0.0
    %350 = vmatpush.msra.mxu0 0.0
    %351 = vmatpush.msra.mxu0 0.0
    %352 = vmatpush.msra.mxu0 0.0
    %353 = vmatpush.msra.mxu0 0.0
    %354 = vmatpush.msra.mxu0 0.0
    %355 = vmatpush.msra.mxu0 0.0
    %356 = vmatpush.msra.mxu0 0.0
    %357 = vmatpush.msra.mxu0 0.0
    %358 = vmatpush.msra.mxu0 0.0
    %359 = vmatpush.msra.mxu0 %v343
    %360 = vmatmul.f32.gmra.mxu0 %v317
    %v361 = vpop.f32.mrf.mxu0
    %v362 = vadd.f32 0.0, %v361
    %363 = vdwg.mxu0
    %v364 = vadd.f32 %v342, %v362
    %365 = vst.msk [vmem:[#allocation3] sm:$0x3] %vm340, %v364
    // Predicated region
    $region46: #{tpu_custom_call.1} parent=1 // pred_check
      %p366 = pneg %p66
    $region47: #{tpu_custom_call.1} parent=1 // pred_check_branch
      %368 = sbr.rel (%p366) target = $region49
    $region48: #{tpu_custom_call.1} parent=1 // pred_region
      %v369 = vld [vmem:[#allocation2] sm:$0x3]
      %v370 = vld [vmem:[#allocation3] sm:$0x3]
      %v371 = vrcp.pop %v369
      %v372 = vmul.f32 %v369, %v371
      %v373 = vsub.f32 1.0, %v372
      %v374 = vmul.f32 %v371, %v373
      %v375 = vadd.f32 %v371, %v374
      %vm376 = vweird.f32 %v369
      %vm377 = vweird.f32 %v371
      %vm378 = vmor %vm376, %vm377
      %v379 = vsel %vm378, %v371, %v375
      %v380 = vand.u32 2147483647, %v369
      %vm381 = vcmp.eq.f32.partialorder %v380, 8.507059e+37
      %v382 = vand.u32 %v369, 2147483648
      %v383 = vor.u32 1.1754944e-38, %v382
      %v384 = vsel %vm381, %v383, %v379
      %v385 = vmul.f32 1.0, %v384
      %v386 = vmul.f32 %v385, %v370
      %v387 = vrsqrt.pop %v385
      %v388 = vmul.f32 %v387, %v385
      %v389 = vmul.f32 %v388, %v387
      %v390 = vmul.f32 0.5, %v389
      %v391 = vsub.f32 1.5, %v390
      %v392 = vmul.f32 %v387, %v391
      %v393 = vmul.f32 %v385, %v392
      %vm394 = vcmp.eq.f32.partialorder %v385, inf
      %v395 = vsel %vm394, %v385, %v393
      %vm396 = vcmp.eq.f32.partialorder %v385, 0.0
      %v397 = vand.u32 %v385, 2147483648
      %v398 = vsel %vm396, %v397, %v395
      %v399 = vld [vmem:[%s10] sm:$0x3]
      %v400 = vmul.f32 %v398, %v399
      %v401 = vadd.f32 %v386, %v400
      %402 = vst.msk [vmem:[#allocation6] sm:$0x3] %vm340, %v401
      %v403 = vlog2.pop %v369
      %v404 = vmul.f32 %v403, 0.6931472
      %v405 = vadd.f32 %v404, %v385
      %v406 = vmul.f32 %v386, %v386
      %v407 = vadd.f32 %v405, %v406
      %v408 = vsub.f32 %v407, 1.0
      %v409 = vmul.f32 %v408, 0.5
      %v410 = vsel %vm340, %v409, 0.0
      %411 = vadd.xlane.f32.xlu0 %v410
      %v412 = vpop.xlane.xlu0 %411
      %vm413 = vcmask 1041408
      %v414 = vsel %vm413, %v412, 0.0
      %v415 = vrot.slane %v414, 4
      %v416 = vadd.f32 %v414, %v415
      %v417 = vrot.slane %v416, 2
      %v418 = vadd.f32 %v416, %v417
      %v419 = vrot.slane %v418, 1
      %v420 = vadd.f32 %v418, %v419
      %v421 = vrcp.pop 2.0
      %v422 = vmul.f32 2.0, %v421
      %v423 = vsub.f32 1.0, %v422
      %v424 = vmul.f32 %v421, %v423
      %v425 = vadd.f32 %v421, %v424
      %vm426 = vweird.f32 %v421
      %v427 = vsel %vm426, %v421, %v425
      %v428 = vmul.f32 %v420, %v427
      %vm429 = vcmask 0
      %430 = vst.msk [vmem:[#allocation8] sm:$0x1] %vm429, %v428
    $region49: #{tpu_custom_call.1} parent=1 // pred_fallthru
      _
    // Predicated region
    $region50: #{tpu_custom_call.1} parent=1 // pred_check
      _
    $region51: #{tpu_custom_call.1} parent=1 // pred_check_branch
      %432 = sbr.rel (0) target = $region53
    $region52: #{tpu_custom_call.1} parent=1 // pred_region
      %434 = vsyncadd [#allocation7], 0
      %s436 = sshll.u32 [#allocation6], 4
      %s437 = int_to_ptr.vmem [resolvable:$true] %s436
      %s438 = sshll.u32 %s11, 4
      %s439 = int_to_ptr.hbm [resolvable:$true] %s438
      %441 = dma.vmem_to_hbm [thread:$0]  %s437, 32, %s439, [#allocation7]
    $region53: #{tpu_custom_call.1} parent=1 // pred_fallthru
      _
    // Predicated region
    $region54: #{tpu_custom_call.1} parent=1 // pred_check
      _
    $region55: #{tpu_custom_call.1} parent=1 // pred_check_branch
      %443 = sbr.rel (0) target = $region57
    $region56: #{tpu_custom_call.1} parent=1 // pred_region
      %445 = vsyncadd [#allocation9], 0
      %s447 = sshll.u32 [#allocation8], 4
      %s448 = int_to_ptr.vmem [resolvable:$true] %s447
      %s449 = sshll.u32 %s12, 4
      %s450 = int_to_ptr.hbm [resolvable:$true] %s449
      %452 = dma.vmem_to_hbm [thread:$0]  %s448, 16, %s450, [#allocation9]
    $region57: #{tpu_custom_call.1} parent=1 // pred_fallthru
      _
    // Predicated region
    $region58: #{tpu_custom_call.1} parent=1 // pred_check
      _
    $region59: #{tpu_custom_call.1} parent=1 // pred_check_branch
      %454 = sbr.rel (0) target = $region61
    $region60: #{tpu_custom_call.1} parent=1 // pred_region
      %456 = dma.done [#allocation7], 32
    $region61: #{tpu_custom_call.1} parent=1 // pred_fallthru
      _
    // Predicated region
    $region62: #{tpu_custom_call.1} parent=1 // pred_check
      _
    $region63: #{tpu_custom_call.1} parent=1 // pred_check_branch
      %458 = sbr.rel (0) target = $region65
    $region64: #{tpu_custom_call.1} parent=1 // pred_region
      %460 = dma.done [#allocation9], 16
    $region65: #{tpu_custom_call.1} parent=1 // pred_fallthru
      _
    %461 = vsyncpa [#allocation7], 1
    %462 = vsyncpa [#allocation9], 1

</llo_original>
